<compile_context>
chip_gen: v5e
topology: v5e:2x2
jax: 0.10.0
libtpu: 0.0.40
codegen_flags: <defaults>
</compile_context>

<pallas_src>
import functools

import jax
import jax.numpy as jnp
from jax.experimental import pallas as pl
from jax.experimental.pallas import tpu as pltpu

H_DIM = 200   # hard-coded in the torch module's __init__
H_PAD = 256   # zero-padded hidden dim (multiple of 128)


def _round_up(n, m):
    return ((n + m - 1) // m) * m


def _discriminator_kernel(x_ref, w1_ref, b1_ref, w2_ref, b2_ref, w3_ref, b3_ref,
                          o_ref):
    # Layer 1: Linear(x_dim -> 256) + ReLU   (MXU bf16 inputs, f32 accumulate)
    x = x_ref[...].astype(jnp.bfloat16)
    h1 = jnp.dot(x, w1_ref[...], preferred_element_type=jnp.float32)
    h1 = jnp.maximum(h1 + b1_ref[...], 0.0)

    # Layer 2: Linear(256 -> 256) + ReLU
    h2 = jnp.dot(h1.astype(jnp.bfloat16), w2_ref[...],
                 preferred_element_type=jnp.float32)
    h2 = jnp.maximum(h2 + b2_ref[...], 0.0)

    # Layer 3: Linear(256 -> 1) as VPU multiply + lane reduction (XLU slot),
    # avoiding a width-1 MXU matmul.
    out = jnp.sum(h2 * w3_ref[...], axis=-1, keepdims=True) + b3_ref[...]
    o_ref[...] = out


@functools.partial(jax.jit, static_argnames=("block_b",))
def discriminator_forward(x, kernel_params, *, block_b=1024):
    """x: (B, x_dim) float32; kernel_params: padded/packed dict (see pack_params)."""
    B, x_dim = x.shape
    w1, b1 = kernel_params["w1"], kernel_params["b1"]
    w2, b2 = kernel_params["w2"], kernel_params["b2"]
    w3, b3 = kernel_params["w3"], kernel_params["b3"]

    # Tile the batch dim: TB rows per grid step (rounded to sublane multiple).
    tb = min(block_b, _round_up(B, 8))
    b_pad = _round_up(B, tb)
    if b_pad != B:
        x = jnp.pad(x, ((0, b_pad - B), (0, 0)))

    grid = (pl.cdiv(b_pad, tb),)
    const2d = lambda i: (0, 0)   # weights/biases stay VMEM-resident across tiles

    out = pl.pallas_call(
        _discriminator_kernel,
        out_shape=jax.ShapeDtypeStruct((b_pad, 1), jnp.float32),
        grid=grid,
        in_specs=[
            pl.BlockSpec((tb, x_dim), lambda i: (i, 0)),
            pl.BlockSpec(w1.shape, const2d),
            pl.BlockSpec(b1.shape, const2d),
            pl.BlockSpec(w2.shape, const2d),
            pl.BlockSpec(b2.shape, const2d),
            pl.BlockSpec(w3.shape, const2d),
            pl.BlockSpec(b3.shape, const2d),
        ],
        out_specs=pl.BlockSpec((tb, 1), lambda i: (i, 0)),
        compiler_params=pltpu.CompilerParams(
            dimension_semantics=("parallel",),
            vmem_limit_bytes=32 * 1024 * 1024,
        ),
    )(x, w1, b1, w2, b2, w3, b3)
    return out[:B]


def init_params(key, x_dim, h_dim=H_DIM):
    """Logical (unpadded, f32) parameters matching the torch module layout,
    stored transposed relative to torch, i.e. (in, out)."""
    k1, k2, k3 = jax.random.split(key, 3)

    def xavier_normal(k, fan_in, fan_out):
        std = (2.0 / (fan_in + fan_out)) ** 0.5
        return jax.random.normal(k, (fan_in, fan_out), jnp.float32) * std

    return {
        "w1": xavier_normal(k1, x_dim, h_dim),
        "b1": jnp.zeros((h_dim,), jnp.float32),
        "w2": xavier_normal(k2, h_dim, h_dim),
        "b2": jnp.zeros((h_dim,), jnp.float32),
        "w3": xavier_normal(k3, h_dim, 1),
        "b3": jnp.zeros((1,), jnp.float32),
    }


def pack_params(p, h_pad=H_PAD):
    """Zero-pad hidden dim 200 -> 256 and cast matmul weights to bf16."""
    h = p["w1"].shape[1]
    pad = h_pad - h
    return {
        "w1": jnp.pad(p["w1"], ((0, 0), (0, pad))).astype(jnp.bfloat16),
        "b1": jnp.pad(p["b1"], (0, pad)).reshape(1, h_pad).astype(jnp.float32),
        "w2": jnp.pad(p["w2"], ((0, pad), (0, pad))).astype(jnp.bfloat16),
        "b2": jnp.pad(p["b2"], (0, pad)).reshape(1, h_pad).astype(jnp.float32),
        # Final layer kept f32: it is applied on the VPU/XLU, not the MXU.
        "w3": jnp.pad(p["w3"][:, 0], (0, pad)).reshape(1, h_pad).astype(jnp.float32),
        "b3": p["b3"].reshape(1, 1).astype(jnp.float32),
    }


def _reference(x, p):
    """Pure-JAX f32 reference of the torch forward."""
    h1 = jnp.maximum(x @ p["w1"] + p["b1"], 0.0)
    h2 = jnp.maximum(h1 @ p["w2"] + p["b2"], 0.0)
    return h2 @ p["w3"] + p["b3"]


if __name__ == "__main__":
    key = jax.random.PRNGKey(0)
    kx, kx2, kp = jax.random.split(key, 3)

    B, X_DIM = 8, 16
    x = jax.random.normal(kx, (B, X_DIM), jnp.float32)
    params = init_params(kp, X_DIM)
    kparams = pack_params(params)

    # Small-batch run (single tile).
    out = discriminator_forward(x, kparams)
    out = jax.block_until_ready(out)
    ref = _reference(x, params)
    assert out.shape == (B, 1)
    # bf16 matmul inputs => loose tolerance vs the f32 reference.
    assert jnp.allclose(out, ref, atol=5e-2, rtol=5e-2), (
        float(jnp.max(jnp.abs(out - ref))))

    # Multi-tile run (exercises the batch grid, padding, and resident weights).
    B2 = 1030
    x2 = jax.random.normal(kx2, (B2, X_DIM), jnp.float32)
    out2 = jax.block_until_ready(discriminator_forward(x2, kparams, block_b=256))
    ref2 = _reference(x2, params)
    assert out2.shape == (B2, 1)
    assert jnp.allclose(out2, ref2, atol=5e-2, rtol=5e-2), (
        float(jnp.max(jnp.abs(out2 - ref2))))

    print("KERNEL_OK")
</pallas_src>

<mosaic_0001>
module attributes {stable_mosaic.version = 11 : i64} {
  func.func @_discriminator_kernel(%arg0: i32, %arg1: memref<8x16xf32, #tpu.memory_space<vmem>>, %arg2: memref<16x256xbf16, #tpu.memory_space<vmem>>, %arg3: memref<1x256xf32, #tpu.memory_space<vmem>>, %arg4: memref<256x256xbf16, #tpu.memory_space<vmem>>, %arg5: memref<1x256xf32, #tpu.memory_space<vmem>>, %arg6: memref<1x256xf32, #tpu.memory_space<vmem>>, %arg7: memref<1x1xf32, #tpu.memory_space<vmem>>, %arg8: memref<8x1xf32, #tpu.memory_space<vmem>>) attributes {dimension_semantics = [#tpu.dimension_semantics<parallel>], iteration_bounds = array<i64: 1>, scalar_prefetch = 0 : i64, scratch_operands = 0 : i64, tpu.core_type = #tpu.core_type<tc>, window_params = [{transform_indices = @transform_0, window_bounds = array<i64: 8, 16>}, {pipeline_mode = #tpu.pipeline_mode<synchronous>, transform_indices = @transform_1, window_bounds = array<i64: 16, 256>}, {pipeline_mode = #tpu.pipeline_mode<synchronous>, transform_indices = @transform_2, window_bounds = array<i64: 1, 256>}, {pipeline_mode = #tpu.pipeline_mode<synchronous>, transform_indices = @transform_3, window_bounds = array<i64: 256, 256>}, {pipeline_mode = #tpu.pipeline_mode<synchronous>, transform_indices = @transform_4, window_bounds = array<i64: 1, 256>}, {pipeline_mode = #tpu.pipeline_mode<synchronous>, transform_indices = @transform_5, window_bounds = array<i64: 1, 256>}, {pipeline_mode = #tpu.pipeline_mode<synchronous>, transform_indices = @transform_6, window_bounds = array<i64: 1, 1>}, {transform_indices = @transform_7, window_bounds = array<i64: 8, 1>}]} {
    %c0 = arith.constant 0 : index
    %c0_0 = arith.constant 0 : index
    %0 = vector.load %arg1[%c0, %c0_0] : memref<8x16xf32, #tpu.memory_space<vmem>>, vector<8x16xf32>
    %1 = arith.truncf %0 : vector<8x16xf32> to vector<8x16xbf16>
    %c0_1 = arith.constant 0 : index
    %c0_2 = arith.constant 0 : index
    %2 = vector.load %arg2[%c0_1, %c0_2] : memref<16x256xbf16, #tpu.memory_space<vmem>>, vector<16x256xbf16>
    %cst = arith.constant dense<0.000000e+00> : vector<8x256xf32>
    %3 = tpu.matmul %1, %2, %cst {dimension_numbers = #tpu.dot_dimension_numbers<[1], [0], [0], [1], [0, 0, 1, 1], [], []>} : vector<8x16xbf16>, vector<16x256xbf16>, vector<8x256xf32> -> vector<8x256xf32>
    %c0_3 = arith.constant 0 : index
    %c0_4 = arith.constant 0 : index
    %4 = vector.load %arg3[%c0_3, %c0_4] : memref<1x256xf32, #tpu.memory_space<vmem>>, vector<1x256xf32>
    %5 = vector.broadcast %4 : vector<1x256xf32> to vector<8x256xf32>
    %6 = arith.addf %3, %5 : vector<8x256xf32>
    %cst_5 = arith.constant 0.000000e+00 : f32
    %7 = vector.broadcast %cst_5 : f32 to vector<8x256xf32>
    %8 = arith.maximumf %6, %7 : vector<8x256xf32>
    %9 = arith.truncf %8 : vector<8x256xf32> to vector<8x256xbf16>
    %c0_6 = arith.constant 0 : index
    %c0_7 = arith.constant 0 : index
    %10 = vector.load %arg4[%c0_6, %c0_7] : memref<256x256xbf16, #tpu.memory_space<vmem>>, vector<256x256xbf16>
    %cst_8 = arith.constant dense<0.000000e+00> : vector<8x256xf32>
    %11 = tpu.matmul %9, %10, %cst_8 {dimension_numbers = #tpu.dot_dimension_numbers<[1], [0], [0], [1], [0, 0, 1, 1], [], []>} : vector<8x256xbf16>, vector<256x256xbf16>, vector<8x256xf32> -> vector<8x256xf32>
    %c0_9 = arith.constant 0 : index
    %c0_10 = arith.constant 0 : index
    %12 = vector.load %arg5[%c0_9, %c0_10] : memref<1x256xf32, #tpu.memory_space<vmem>>, vector<1x256xf32>
    %13 = vector.broadcast %12 : vector<1x256xf32> to vector<8x256xf32>
    %14 = arith.addf %11, %13 : vector<8x256xf32>
    %cst_11 = arith.constant 0.000000e+00 : f32
    %15 = vector.broadcast %cst_11 : f32 to vector<8x256xf32>
    %16 = arith.maximumf %14, %15 : vector<8x256xf32>
    %c0_12 = arith.constant 0 : index
    %c0_13 = arith.constant 0 : index
    %17 = vector.load %arg6[%c0_12, %c0_13] : memref<1x256xf32, #tpu.memory_space<vmem>>, vector<1x256xf32>
    %18 = vector.broadcast %17 : vector<1x256xf32> to vector<8x256xf32>
    %19 = arith.mulf %16, %18 : vector<8x256xf32>
    %cst_14 = arith.constant dense<0.000000e+00> : vector<8xf32>
    %20 = vector.multi_reduction <add>, %19, %cst_14 [1] : vector<8x256xf32> to vector<8xf32>
    %21 = vector.shape_cast %20 : vector<8xf32> to vector<8x1xf32>
    %c0_15 = arith.constant 0 : index
    %c0_16 = arith.constant 0 : index
    %22 = vector.load %arg7[%c0_15, %c0_16] : memref<1x1xf32, #tpu.memory_space<vmem>>, vector<1x1xf32>
    %23 = vector.broadcast %22 : vector<1x1xf32> to vector<8x1xf32>
    %24 = arith.addf %21, %23 : vector<8x1xf32>
    %c0_17 = arith.constant 0 : index
    %c0_18 = arith.constant 0 : index
    %25 = vector.load %arg8[%c0_17, %c0_18] : memref<8x1xf32, #tpu.memory_space<vmem>>, vector<8x1xf32>
    tpu.vector_store %arg8[%c0_17, %c0_18], %24 {strides = array<i32>} : memref<8x1xf32, #tpu.memory_space<vmem>>, vector<8x1xf32>,
    return
  }
  func.func @transform_0(%arg0: i32) -> (i32, i32) {
    %c0_i32 = arith.constant 0 : i32
    %c0_i32_0 = arith.constant 0 : i32
    return %arg0, %c0_i32 : i32, i32
  }
  func.func @transform_1(%arg0: i32) -> (i32, i32) {
    %c0_i32 = arith.constant 0 : i32
    %c0_i32_0 = arith.constant 0 : i32
    %c0_i32_1 = arith.constant 0 : i32
    return %c0_i32, %c0_i32_0 : i32, i32
  }
  func.func @transform_2(%arg0: i32) -> (i32, i32) {
    %c0_i32 = arith.constant 0 : i32
    %c0_i32_0 = arith.constant 0 : i32
    %c0_i32_1 = arith.constant 0 : i32
    return %c0_i32, %c0_i32_0 : i32, i32
  }
  func.func @transform_3(%arg0: i32) -> (i32, i32) {
    %c0_i32 = arith.constant 0 : i32
    %c0_i32_0 = arith.constant 0 : i32
    %c0_i32_1 = arith.constant 0 : i32
    return %c0_i32, %c0_i32_0 : i32, i32
  }
  func.func @transform_4(%arg0: i32) -> (i32, i32) {
    %c0_i32 = arith.constant 0 : i32
    %c0_i32_0 = arith.constant 0 : i32
    %c0_i32_1 = arith.constant 0 : i32
    return %c0_i32, %c0_i32_0 : i32, i32
  }
  func.func @transform_5(%arg0: i32) -> (i32, i32) {
    %c0_i32 = arith.constant 0 : i32
    %c0_i32_0 = arith.constant 0 : i32
    %c0_i32_1 = arith.constant 0 : i32
    return %c0_i32, %c0_i32_0 : i32, i32
  }
  func.func @transform_6(%arg0: i32) -> (i32, i32) {
    %c0_i32 = arith.constant 0 : i32
    %c0_i32_0 = arith.constant 0 : i32
    %c0_i32_1 = arith.constant 0 : i32
    return %c0_i32, %c0_i32_0 : i32, i32
  }
  func.func @transform_7(%arg0: i32) -> (i32, i32) {
    %c0_i32 = arith.constant 0 : i32
    %c0_i32_0 = arith.constant 0 : i32
    return %arg0, %c0_i32 : i32, i32
  }
}

</mosaic_0001>

<llo_original>
// kernel: discriminator_forward.1
$region0: #{discriminator_forward.1}
  #allocation0 [shape = 'u32[]', space=smem, size = 0x4, offset = 0x4, fixed_abs, tag = 'smem constant byte address 0x4 - core index']
  #allocation1 [shape = 'u32[72,128]{1,0:T(1,128)}', space=vmem, size = 0x9000, scoped, tag = 'internal scratch']
  #allocation2 [shape = 'f32[1,1]{1,0:T(1,128)S(1)}', space=vmem, size = 0x200, scoped, tag = 'scoped memory for discriminator_forward.1']
  %s0 = inlined_call_operand.hbm [shape: f32[8,16], index: 0, kind: input, shape index: {}]
  %s1 = inlined_call_operand.hbm [shape: bf16[16,256], index: 1, kind: input, shape index: {}]
  %s2 = inlined_call_operand.vmem [shape: f32[1,256], index: 2, kind: input, shape index: {}]
  %s3 = inlined_call_operand.hbm [shape: bf16[256,256], index: 3, kind: input, shape index: {}]
  %s4 = inlined_call_operand.hbm [shape: f32[1,256], index: 4, kind: input, shape index: {}]
  %s5 = inlined_call_operand.vmem [shape: f32[1,256], index: 5, kind: input, shape index: {}]
  %s6 = inlined_call_operand.<no memory space> [shape: f32[1,1], index: 6, kind: input, shape index: {}]
  %s7 = inlined_call_operand.vmem [shape: f32[8,1], index: 7, kind: output, shape index: {}]
  %s8 = sld [smem:[#allocation0]]
  $region54: #{discriminator_forward.1} parent=0
    _
  %s10 = ssub.s32 1, %s8
  %s11 = scalar_select 0, %s10, %s8
  %v12 = vstv %s6
  %13 = vst [vmem:[#allocation2] sm:$0x1] %v12
  $region1: #{discriminator_forward.1} parent=0
    #allocation3 [shape = 'u8[4096]{0}', space=vmem, size = 0x1000, scoped, tag = 'input window, operand 0, single buffered']
    #allocation4 [shape = 's32[1]{0}', space=sflag, size = 0x4, scoped, tag = 'scoped memory for discriminator_forward.1']
    #allocation5 [shape = 'u8[8192]{0}', space=vmem, size = 0x2000, scoped, tag = 'input window, operand 1, single buffered']
    #allocation6 [shape = 's32[1]{0}', space=sflag, size = 0x4, scoped, tag = 'scoped memory for discriminator_forward.1']
    #allocation7 [shape = 'u8[131072]{0}', space=vmem, size = 0x20000, scoped, tag = 'input window, operand 3, single buffered']
    #allocation8 [shape = 'u8[1024]{0}', space=vmem, size = 0x400, scoped, tag = 'input window, operand 4, single buffered']
    #allocation9 [shape = 's32[1]{0}', space=sflag, size = 0x4, scoped, tag = 'scoped memory for discriminator_forward.1']
    %14 = vsyncpa [#allocation4], 0
    %15 = vsyncpa [#allocation6], 0
    %16 = vsyncpa [#allocation9], 0
    // Predicated region
    $region2: #{discriminator_forward.1} parent=1 // pred_check
      _
    $region3: #{discriminator_forward.1} parent=1 // pred_check_branch
      %18 = sbr.rel (0) target = $region5
    $region4: #{discriminator_forward.1} parent=1 // pred_region
      %20 = vsyncadd [#allocation4], 0
      %s22 = sshll.u32 %s0, 4
      %s23 = int_to_ptr.hbm [resolvable:$true] %s22
      %s24 = sshll.u32 [#allocation3], 4
      %s25 = int_to_ptr.vmem [resolvable:$true] %s24
      %27 = dma.hbm_to_vmem [thread:$0]  %s23, 128, %s25, [#allocation4]
    $region5: #{discriminator_forward.1} parent=1 // pred_fallthru
      _
    // Predicated region
    $region6: #{discriminator_forward.1} parent=1 // pred_check
      _
    $region7: #{discriminator_forward.1} parent=1 // pred_check_branch
      %29 = sbr.rel (0) target = $region9
    $region8: #{discriminator_forward.1} parent=1 // pred_region
      %31 = vsyncadd [#allocation6], 0
      %s32 = sshll.u32 %s1, 4
      %s33 = int_to_ptr.hbm [resolvable:$true] %s32
      %s34 = sshll.u32 [#allocation5], 4
      %s35 = int_to_ptr.vmem [resolvable:$true] %s34
      %40 = dma.hbm_to_vmem [thread:$0]  %s33, 256, %s35, [#allocation6], 128, 128, 8
    $region9: #{discriminator_forward.1} parent=1 // pred_fallthru
      _
    // Predicated region
    $region10: #{discriminator_forward.1} parent=1 // pred_check
      _
    $region11: #{discriminator_forward.1} parent=1 // pred_check_branch
      %42 = sbr.rel (0) target = $region13
    $region12: #{discriminator_forward.1} parent=1 // pred_region
      _
    $region13: #{discriminator_forward.1} parent=1 // pred_fallthru
      _
    // Predicated region
    $region14: #{discriminator_forward.1} parent=1 // pred_check
      _
    $region15: #{discriminator_forward.1} parent=1 // pred_check_branch
      %44 = sbr.rel (0) target = $region17
    $region16: #{discriminator_forward.1} parent=1 // pred_region
      %46 = vsyncadd [#allocation6], 0
      %s47 = sshll.u32 %s3, 4
      %s48 = int_to_ptr.hbm [resolvable:$true] %s47
      %s49 = sshll.u32 [#allocation7], 4
      %s50 = int_to_ptr.vmem [resolvable:$true] %s49
      %55 = dma.hbm_to_vmem [thread:$0]  %s48, 4096, %s50, [#allocation6], 128, 128, 8
    $region17: #{discriminator_forward.1} parent=1 // pred_fallthru
      _
    // Predicated region
    $region18: #{discriminator_forward.1} parent=1 // pred_check
      _
    $region19: #{discriminator_forward.1} parent=1 // pred_check_branch
      %57 = sbr.rel (0) target = $region21
    $region20: #{discriminator_forward.1} parent=1 // pred_region
      %59 = vsyncadd [#allocation9], 0
      %s61 = sshll.u32 %s4, 4
      %s62 = int_to_ptr.hbm [resolvable:$true] %s61
      %s63 = sshll.u32 [#allocation8], 4
      %s64 = int_to_ptr.vmem [resolvable:$true] %s63
      %66 = dma.hbm_to_vmem [thread:$0]  %s62, 32, %s64, [#allocation9]
    $region21: #{discriminator_forward.1} parent=1 // pred_fallthru
      _
    // Predicated region
    $region22: #{discriminator_forward.1} parent=1 // pred_check
      _
    $region23: #{discriminator_forward.1} parent=1 // pred_check_branch
      %68 = sbr.rel (0) target = $region25
    $region24: #{discriminator_forward.1} parent=1 // pred_region
      _
    $region25: #{discriminator_forward.1} parent=1 // pred_fallthru
      _
    // Predicated region
    $region26: #{discriminator_forward.1} parent=1 // pred_check
      _
    $region27: #{discriminator_forward.1} parent=1 // pred_check_branch
      %70 = sbr.rel (0) target = $region29
    $region28: #{discriminator_forward.1} parent=1 // pred_region
      _
    $region29: #{discriminator_forward.1} parent=1 // pred_fallthru
      _
    // Predicated region
    $region30: #{discriminator_forward.1} parent=1 // pred_check
      _
    $region31: #{discriminator_forward.1} parent=1 // pred_check_branch
      %72 = sbr.rel (0) target = $region33
    $region32: #{discriminator_forward.1} parent=1 // pred_region
      %74 = dma.done [#allocation4], 128
    $region33: #{discriminator_forward.1} parent=1 // pred_fallthru
      _
    // Predicated region
    $region34: #{discriminator_forward.1} parent=1 // pred_check
      _
    $region35: #{discriminator_forward.1} parent=1 // pred_check_branch
      %76 = sbr.rel (0) target = $region37
    $region36: #{discriminator_forward.1} parent=1 // pred_region
      %78 = dma.done [#allocation6], 256
    $region37: #{discriminator_forward.1} parent=1 // pred_fallthru
      _
    // Predicated region
    $region38: #{discriminator_forward.1} parent=1 // pred_check
      _
    $region39: #{discriminator_forward.1} parent=1 // pred_check_branch
      %80 = sbr.rel (0) target = $region41
    $region40: #{discriminator_forward.1} parent=1 // pred_region
      %82 = dma.done [#allocation6], 4096
    $region41: #{discriminator_forward.1} parent=1 // pred_fallthru
      _
    // Predicated region
    $region42: #{discriminator_forward.1} parent=1 // pred_check
      _
    $region43: #{discriminator_forward.1} parent=1 // pred_check_branch
      %84 = sbr.rel (0) target = $region45
    $region44: #{discriminator_forward.1} parent=1 // pred_region
      %86 = dma.done [#allocation9], 32
    $region45: #{discriminator_forward.1} parent=1 // pred_fallthru
      _
    %v88 = vld [vmem:[#allocation3] sm:$0xff]
    %v89 = vpack.c.bf16 %v88, %v88
    %v90 = vld [vmem:[#allocation5] sm:$0xff]
    %v91 = vld [vmem:[#allocation5 + $0x8] sm:$0xff]
    %v92 = vld [vmem:[%s2] sm:$0x3]
    %v94 = vperm.slane %v92, 0
    %v95 = vperm.slane %v92, 1
    %v100 = vunpack.c.l.b16 %v90
    %v101 = vunpack.c.h.b16 %v90
    %v102 = vunpack.c.l.b16 %v91
    %v103 = vunpack.c.h.b16 %v91
    %v104 = vpack.c.b16 %v102, %v100
    %v105 = vpack.c.b16 %v103, %v101
    %vm108 = vcmask 130048
    %v110 = vsel %vm108, %v89, 0
    %112 = vmatpush.bf16.msra.mxu0 0
    %113 = vmatpush.bf16.msra.mxu0 0
    %114 = vmatpush.bf16.msra.mxu0 0
    %115 = vmatpush.bf16.msra.mxu0 0
    %116 = vmatpush.bf16.msra.mxu0 0
    %117 = vmatpush.bf16.msra.mxu0 0
    %118 = vmatpush.bf16.msra.mxu0 0
    %119 = vmatpush.bf16.msra.mxu0 %v104
    %120 = vmatmul.bf16.gmra.mxu0 %v110
    %v121 = vpop.f32.mrf.mxu0
    %v122 = vadd.f32 %v94, %v121
    %v123 = vpop.f32.mrf.mxu0
    %124 = vdwg.mxu0
    %125 = vmatpush.bf16.msra.mxu0 0
    %126 = vmatpush.bf16.msra.mxu0 0
    %127 = vmatpush.bf16.msra.mxu0 0
    %128 = vmatpush.bf16.msra.mxu0 0
    %129 = vmatpush.bf16.msra.mxu0 0
    %130 = vmatpush.bf16.msra.mxu0 0
    %131 = vmatpush.bf16.msra.mxu0 0
    %132 = vmatpush.bf16.msra.mxu0 %v105
    %133 = vmatmul.bf16.gmra.mxu0 %v110
    %v134 = vpop.f32.mrf.mxu0
    %v135 = vadd.f32 %v95, %v134
    %v136 = vpop.f32.mrf.mxu0
    %137 = vdwg.mxu0
    %v138 = vmax.f32 %v122, 0.0
    %v139 = vmax.f32 %v135, 0.0
    %v140 = vpack.c.bf16 %v138, %v138
    %v141 = vpack.c.bf16 %v139, %v139
    %v142 = vld [vmem:[#allocation7] sm:$0xff]
    %v143 = vld [vmem:[#allocation7 + $0x8] sm:$0xff]
    %v144 = vld [vmem:[#allocation7 + $0x10] sm:$0xff]
    %v145 = vld [vmem:[#allocation7 + $0x18] sm:$0xff]
    %v146 = vld [vmem:[#allocation7 + $0x20] sm:$0xff]
    %v147 = vld [vmem:[#allocation7 + $0x28] sm:$0xff]
    %v148 = vld [vmem:[#allocation7 + $0x30] sm:$0xff]
    %v149 = vld [vmem:[#allocation7 + $0x38] sm:$0xff]
    %v150 = vld [vmem:[#allocation7 + $0x40] sm:$0xff]
    %v151 = vld [vmem:[#allocation7 + $0x48] sm:$0xff]
    %v152 = vld [vmem:[#allocation7 + $0x50] sm:$0xff]
    %v153 = vld [vmem:[#allocation7 + $0x58] sm:$0xff]
    %v154 = vld [vmem:[#allocation7 + $0x60] sm:$0xff]
    %v155 = vld [vmem:[#allocation7 + $0x68] sm:$0xff]
    %v156 = vld [vmem:[#allocation7 + $0x70] sm:$0xff]
    %v157 = vld [vmem:[#allocation7 + $0x78] sm:$0xff]
    %v158 = vld [vmem:[#allocation7 + $0x80] sm:$0xff]
    %v159 = vld [vmem:[#allocation7 + $0x88] sm:$0xff]
    %v160 = vld [vmem:[#allocation7 + $0x90] sm:$0xff]
    %v161 = vld [vmem:[#allocation7 + $0x98] sm:$0xff]
    %v162 = vld [vmem:[#allocation7 + $0xa0] sm:$0xff]
    %v163 = vld [vmem:[#allocation7 + $0xa8] sm:$0xff]
    %v164 = vld [vmem:[#allocation7 + $0xb0] sm:$0xff]
    %v165 = vld [vmem:[#allocation7 + $0xb8] sm:$0xff]
    %v166 = vld [vmem:[#allocation7 + $0xc0] sm:$0xff]
    %v167 = vld [vmem:[#allocation7 + $0xc8] sm:$0xff]
    %v168 = vld [vmem:[#allocation7 + $0xd0] sm:$0xff]
    %v169 = vld [vmem:[#allocation7 + $0xd8] sm:$0xff]
    %v170 = vld [vmem:[#allocation7 + $0xe0] sm:$0xff]
    %v171 = vld [vmem:[#allocation7 + $0xe8] sm:$0xff]
    %v172 = vld [vmem:[#allocation7 + $0xf0] sm:$0xff]
    %v173 = vld [vmem:[#allocation7 + $0xf8] sm:$0xff]
    %v174 = vld [vmem:[#allocation8] sm:$0x3]
    %v176 = vperm.slane %v174, 0
    %v177 = vperm.slane %v174, 1
    %v212 = vunpack.c.l.b16 %v142
    %v213 = vunpack.c.h.b16 %v142
    %v214 = vunpack.c.l.b16 %v143
    %v215 = vunpack.c.h.b16 %v143
    %v216 = vunpack.c.l.b16 %v144
    %v217 = vunpack.c.h.b16 %v144
    %v218 = vunpack.c.l.b16 %v145
    %v219 = vunpack.c.h.b16 %v145
    %v220 = vunpack.c.l.b16 %v146
    %v221 = vunpack.c.h.b16 %v146
    %v222 = vunpack.c.l.b16 %v147
    %v223 = vunpack.c.h.b16 %v147
    %v224 = vunpack.c.l.b16 %v148
    %v225 = vunpack.c.h.b16 %v148
    %v226 = vunpack.c.l.b16 %v149
    %v227 = vunpack.c.h.b16 %v149
    %v228 = vunpack.c.l.b16 %v150
    %v229 = vunpack.c.h.b16 %v150
    %v230 = vunpack.c.l.b16 %v151
    %v231 = vunpack.c.h.b16 %v151
    %v232 = vunpack.c.l.b16 %v152
    %v233 = vunpack.c.h.b16 %v152
    %v234 = vunpack.c.l.b16 %v153
    %v235 = vunpack.c.h.b16 %v153
    %v236 = vunpack.c.l.b16 %v154
    %v237 = vunpack.c.h.b16 %v154
    %v238 = vunpack.c.l.b16 %v155
    %v239 = vunpack.c.h.b16 %v155
    %v240 = vunpack.c.l.b16 %v156
    %v241 = vunpack.c.h.b16 %v156
    %v242 = vunpack.c.l.b16 %v157
    %v243 = vunpack.c.h.b16 %v157
    %v244 = vunpack.c.l.b16 %v158
    %v245 = vunpack.c.h.b16 %v158
    %v246 = vunpack.c.l.b16 %v159
    %v247 = vunpack.c.h.b16 %v159
    %v248 = vunpack.c.l.b16 %v160
    %v249 = vunpack.c.h.b16 %v160
    %v250 = vunpack.c.l.b16 %v161
    %v251 = vunpack.c.h.b16 %v161
    %v252 = vunpack.c.l.b16 %v162
    %v253 = vunpack.c.h.b16 %v162
    %v254 = vunpack.c.l.b16 %v163
    %v255 = vunpack.c.h.b16 %v163
    %v256 = vunpack.c.l.b16 %v164
    %v257 = vunpack.c.h.b16 %v164
    %v258 = vunpack.c.l.b16 %v165
    %v259 = vunpack.c.h.b16 %v165
    %v260 = vunpack.c.l.b16 %v166
    %v261 = vunpack.c.h.b16 %v166
    %v262 = vunpack.c.l.b16 %v167
    %v263 = vunpack.c.h.b16 %v167
    %v264 = vunpack.c.l.b16 %v168
    %v265 = vunpack.c.h.b16 %v168
    %v266 = vunpack.c.l.b16 %v169
    %v267 = vunpack.c.h.b16 %v169
    %v268 = vunpack.c.l.b16 %v170
    %v269 = vunpack.c.h.b16 %v170
    %v270 = vunpack.c.l.b16 %v171
    %v271 = vunpack.c.h.b16 %v171
    %v272 = vunpack.c.l.b16 %v172
    %v273 = vunpack.c.h.b16 %v172
    %v274 = vunpack.c.l.b16 %v173
    %v275 = vunpack.c.h.b16 %v173
    %v276 = vpack.c.b16 %v214, %v212
    %v277 = vpack.c.b16 %v215, %v213
    %v278 = vpack.c.b16 %v218, %v216
    %v279 = vpack.c.b16 %v219, %v217
    %v280 = vpack.c.b16 %v222, %v220
    %v281 = vpack.c.b16 %v223, %v221
    %v282 = vpack.c.b16 %v226, %v224
    %v283 = vpack.c.b16 %v227, %v225
    %v284 = vpack.c.b16 %v230, %v228
    %v285 = vpack.c.b16 %v231, %v229
    %v286 = vpack.c.b16 %v234, %v232
    %v287 = vpack.c.b16 %v235, %v233
    %v288 = vpack.c.b16 %v238, %v236
    %v289 = vpack.c.b16 %v239, %v237
    %v290 = vpack.c.b16 %v242, %v240
    %v291 = vpack.c.b16 %v243, %v241
    %v292 = vpack.c.b16 %v246, %v244
    %v293 = vpack.c.b16 %v247, %v245
    %v294 = vpack.c.b16 %v250, %v248
    %v295 = vpack.c.b16 %v251, %v249
    %v296 = vpack.c.b16 %v254, %v252
    %v297 = vpack.c.b16 %v255, %v253
    %v298 = vpack.c.b16 %v258, %v256
    %v299 = vpack.c.b16 %v259, %v257
    %v300 = vpack.c.b16 %v262, %v260
    %v301 = vpack.c.b16 %v263, %v261
    %v302 = vpack.c.b16 %v266, %v264
    %v303 = vpack.c.b16 %v267, %v265
    %v304 = vpack.c.b16 %v270, %v268
    %v305 = vpack.c.b16 %v271, %v269
    %v306 = vpack.c.b16 %v274, %v272
    %v307 = vpack.c.b16 %v275, %v273
    %340 = vmatpush.bf16.msra.mxu0 %v290
    %341 = vmatpush.bf16.msra.mxu0 %v288
    %342 = vmatpush.bf16.msra.mxu0 %v286
    %343 = vmatpush.bf16.msra.mxu0 %v284
    %344 = vmatpush.bf16.msra.mxu0 %v282
    %345 = vmatpush.bf16.msra.mxu0 %v280
    %346 = vmatpush.bf16.msra.mxu0 %v278
    %347 = vmatpush.bf16.msra.mxu0 %v276
    %348 = vmatmul.bf16.gmra.mxu0 %v140
    %v349 = vpop.f32.mrf.mxu0
    %v350 = vadd.f32 %v176, %v349
    %v351 = vpop.f32.mrf.mxu0
    %352 = vdwg.mxu0
    %353 = vmatpush.bf16.msra.mxu0 %v306
    %354 = vmatpush.bf16.msra.mxu0 %v304
    %355 = vmatpush.bf16.msra.mxu0 %v302
    %356 = vmatpush.bf16.msra.mxu0 %v300
    %357 = vmatpush.bf16.msra.mxu0 %v298
    %358 = vmatpush.bf16.msra.mxu0 %v296
    %359 = vmatpush.bf16.msra.mxu0 %v294
    %360 = vmatpush.bf16.msra.mxu0 %v292
    %361 = vmatmul.bf16.gmra.mxu0 %v141
    %v362 = vpop.f32.mrf.mxu0
    %v363 = vadd.f32 %v350, %v362
    %v364 = vpop.f32.mrf.mxu0
    %365 = vdwg.mxu0
    %366 = vmatpush.bf16.msra.mxu0 %v291
    %367 = vmatpush.bf16.msra.mxu0 %v289
    %368 = vmatpush.bf16.msra.mxu0 %v287
    %369 = vmatpush.bf16.msra.mxu0 %v285
    %370 = vmatpush.bf16.msra.mxu0 %v283
    %371 = vmatpush.bf16.msra.mxu0 %v281
    %372 = vmatpush.bf16.msra.mxu0 %v279
    %373 = vmatpush.bf16.msra.mxu0 %v277
    %374 = vmatmul.bf16.gmra.mxu0 %v140
    %v375 = vpop.f32.mrf.mxu0
    %v376 = vadd.f32 %v177, %v375
    %v377 = vpop.f32.mrf.mxu0
    %378 = vdwg.mxu0
    %379 = vmatpush.bf16.msra.mxu0 %v307
    %380 = vmatpush.bf16.msra.mxu0 %v305
    %381 = vmatpush.bf16.msra.mxu0 %v303
    %382 = vmatpush.bf16.msra.mxu0 %v301
    %383 = vmatpush.bf16.msra.mxu0 %v299
    %384 = vmatpush.bf16.msra.mxu0 %v297
    %385 = vmatpush.bf16.msra.mxu0 %v295
    %386 = vmatpush.bf16.msra.mxu0 %v293
    %387 = vmatmul.bf16.gmra.mxu0 %v141
    %v388 = vpop.f32.mrf.mxu0
    %v389 = vadd.f32 %v376, %v388
    %v390 = vpop.f32.mrf.mxu0
    %391 = vdwg.mxu0
    %v392 = vmax.f32 %v363, 0.0
    %v393 = vmax.f32 %v389, 0.0
    %v394 = vld [vmem:[%s5] sm:$0x3]
    %v396 = vperm.slane %v394, 0
    %v397 = vperm.slane %v394, 1
    %v400 = vmul.f32 %v392, %v396
    %v401 = vmul.f32 %v393, %v397
    %v402 = vadd.f32 %v400, %v401
    %403 = vadd.xlane.f32.xlu0 %v402
    %v404 = vpop.xlane.xlu0 %403
    %v405 = vld [vmem:[#allocation2] sm:$0x1]
    %v407 = vperm.slane %v405, 0
    %v409 = vadd.f32 %v404, %v407
    %vm410 = vcmask 7168
    %411 = vst.msk [vmem:[%s7] sm:$0xff] %vm410, %v409
    // Predicated region
    $region46: #{discriminator_forward.1} parent=1 // pred_check
      _
    $region47: #{discriminator_forward.1} parent=1 // pred_check_branch
      %413 = sbr.rel (0) target = $region49
    $region48: #{discriminator_forward.1} parent=1 // pred_region
      _
    $region49: #{discriminator_forward.1} parent=1 // pred_fallthru
      _
    // Predicated region
    $region50: #{discriminator_forward.1} parent=1 // pred_check
      _
    $region51: #{discriminator_forward.1} parent=1 // pred_check_branch
      %415 = sbr.rel (0) target = $region53
    $region52: #{discriminator_forward.1} parent=1 // pred_region
      _
    $region53: #{discriminator_forward.1} parent=1 // pred_fallthru
      _
    %416 = vsyncpa [#allocation4], 1
    %417 = vsyncpa [#allocation6], 1
    %418 = vsyncpa [#allocation9], 1

</llo_original>
